<compile_context>
chip_gen: v5e
topology: v5e:2x2
jax: 0.10.0
libtpu: 0.0.40
codegen_flags: <defaults>
</compile_context>

<pallas_src>
import jax
import jax.numpy as jnp
from jax.experimental import pallas as pl
from jax.experimental.pallas import tpu as pltpu


def cls_head_kernel(x_ref, w1_ref, b1_ref, w2_ref, b2_ref, out_ref):
    # x_ref : (TM, d_in)        bf16 tile of flattened tokens (pipelined)
    # w1_ref: (d_in, d_hidden)  bf16 first.weight^T   (VMEM-resident)
    # b1_ref: (1, d_hidden)     f32  first.bias
    # w2_ref: (d_hidden, 1)     bf16 out.weight column (VMEM-resident)
    # b2_ref: (1,)  [SMEM]      f32  out.bias scalar
    # out_ref: (1, 1, TM)       lane-dense row of logits for this tile
    h = jnp.dot(x_ref[...], w1_ref[...], preferred_element_type=jnp.float32)
    h = jnp.maximum(h + b1_ref[...], 0.0)
    # Second projection has a single output unit: run it on the MXU (which has
    # plenty of slack here) instead of a VPU multiply + expensive cross-lane
    # XLU reduce.  h is cast to the streaming dtype so the matmul stays
    # bf16-native; accumulation is still f32.
    y = jnp.dot(h.astype(w2_ref.dtype), w2_ref[...],
                preferred_element_type=jnp.float32) + b2_ref[0]
    out_ref[...] = y.reshape(1, 1, -1).astype(out_ref.dtype)


def cls_head(x, w1, b1, w2, b2, *, tm=2048, compute_dtype=jnp.bfloat16):
    """x: (B, S, d_in) -> (B, S-1), matching CLSHead.forward semantics.

    w1: (d_in, d_hidden)  (= torch first.weight^T)
    b1: (d_hidden,)
    w2: (d_hidden, 1)     (= torch out.weight^T)
    b2: (1,)
    """
    B, S, d_in = x.shape
    d_hidden = w1.shape[1]

    # Run the head over ALL B*S tokens and drop token 0 from the (tiny) output
    # instead of materializing x[:, 1:] in HBM.  Contiguous reshape == free.
    M = B * S
    xs = x.reshape(M, d_in).astype(compute_dtype)
    w1c = w1.astype(compute_dtype)
    w2c = w2.reshape(d_hidden, 1).astype(compute_dtype)
    b1c = b1.reshape(1, d_hidden).astype(jnp.float32)
    b2c = b2.reshape(1).astype(jnp.float32)

    # Tile the token axis.  When tiling, TM must be a multiple of 16 (bf16
    # packs 16 sublanes per vreg); the 2048 default is also lane-aligned (128)
    # for wide unmasked stores and large enough to amortize per-step overhead.
    tm = min(tm, M)
    if tm < M:
        tm = max(16, (tm // 16) * 16)
    num_tiles = pl.cdiv(M, tm)

    out = pl.pallas_call(
        cls_head_kernel,
        out_shape=jax.ShapeDtypeStruct((num_tiles, 1, tm), x.dtype),
        grid=(num_tiles,),
        in_specs=[
            pl.BlockSpec((tm, d_in), lambda i: (i, 0)),          # x tile (pipelined)
            pl.BlockSpec((d_in, d_hidden), lambda i: (0, 0)),    # w1 (resident)
            pl.BlockSpec((1, d_hidden), lambda i: (0, 0)),       # b1 (resident)
            pl.BlockSpec((d_hidden, 1), lambda i: (0, 0)),       # w2 column (resident)
            pl.BlockSpec(memory_space=pltpu.MemorySpace.SMEM),   # b2 scalar
        ],
        out_specs=pl.BlockSpec((1, 1, tm), lambda i: (i, 0, 0)),
        compiler_params=pltpu.CompilerParams(
            dimension_semantics=("parallel",),
            # Above the v5e 16 MiB / v6e-v7x 32 MiB scoped defaults, below
            # v7x's 64 MiB physical VMEM.
            vmem_limit_bytes=48 * 1024 * 1024,
        ),
    )(xs, w1c, b1c, w2c, b2c)

    # (num_tiles, 1, TM) -> valid M logits -> (B, S) -> drop CLS column.
    y = out.reshape(num_tiles * tm)[:M].reshape(B, S)
    return y[:, 1:]


def init_params(key, d_in, d_hidden, dtype=jnp.float32):
    """Deterministic init mimicking nn.Linear defaults (uniform +/- 1/sqrt(fan_in))."""
    k1, k2, k3, k4 = jax.random.split(key, 4)
    bound1 = 1.0 / (d_in ** 0.5)
    bound2 = 1.0 / (d_hidden ** 0.5)
    # Stored already transposed relative to torch: (d_in, d_hidden) and (d_hidden, 1).
    w1 = jax.random.uniform(k1, (d_in, d_hidden), dtype, -bound1, bound1)
    b1 = jax.random.uniform(k2, (d_hidden,), dtype, -bound1, bound1)
    w2 = jax.random.uniform(k3, (d_hidden, 1), dtype, -bound2, bound2)
    b2 = jax.random.uniform(k4, (1,), dtype, -bound2, bound2)
    return w1, b1, w2, b2


def cls_head_reference(x, w1, b1, w2, b2):
    """Pure-JAX f32 reference of the PyTorch forward."""
    xs = x[:, 1:, :]
    h = jnp.maximum(jnp.einsum("bsd,dh->bsh", xs, w1) + b1, 0.0)
    y = jnp.einsum("bsh,ho->bso", h, w2) + b2
    return jnp.squeeze(y, axis=2)


if __name__ == "__main__":
    key = jax.random.PRNGKey(0)
    kx, kp, kx2, kp2 = jax.random.split(key, 4)

    # Primary check: small shapes (single tile).
    B, S, d_in, d_hidden = 2, 8, 32, 32
    x = jax.random.normal(kx, (B, S, d_in), jnp.float32)
    w1, b1, w2, b2 = init_params(kp, d_in, d_hidden)
    ref = cls_head_reference(x, w1, b1, w2, b2)

    # (a) exact-path check with f32 streaming (tight tolerance).
    out_f32 = jax.block_until_ready(
        cls_head(x, w1, b1, w2, b2, compute_dtype=jnp.float32))
    assert out_f32.shape == (B, S - 1), out_f32.shape
    assert jnp.allclose(out_f32, ref, atol=1e-5, rtol=1e-5), "mismatch (f32 path)"

    # (b) default bf16-streaming path (loose tolerance vs f32 reference).
    out_bf16 = jax.block_until_ready(cls_head(x, w1, b1, w2, b2))
    assert out_bf16.shape == (B, S - 1), out_bf16.shape
    assert jnp.allclose(out_bf16, ref, atol=3e-2, rtol=3e-2), "mismatch (bf16 path)"

    # Secondary check: multiple tiles with a ragged tail (M=40, TM=16 -> 3 tiles).
    B2, S2, d_in2, d_hidden2 = 4, 10, 128, 64
    x2 = jax.random.normal(kx2, (B2, S2, d_in2), jnp.float32)
    p2 = init_params(kp2, d_in2, d_hidden2)
    ref2 = cls_head_reference(x2, *p2)
    out2 = jax.block_until_ready(cls_head(x2, *p2, tm=16))
    assert out2.shape == (B2, S2 - 1), out2.shape
    assert jnp.allclose(out2, ref2, atol=3e-2, rtol=3e-2), "mismatch (tiled bf16 path)"

    print("KERNEL_OK")
</pallas_src>

<mosaic_0001>
module attributes {stable_mosaic.version = 11 : i64} {
  func.func @cls_head_kernel(%arg0: i32, %arg1: memref<16x32xf32, #tpu.memory_space<vmem>>, %arg2: memref<32x32xf32, #tpu.memory_space<vmem>>, %arg3: memref<1x32xf32, #tpu.memory_space<vmem>>, %arg4: memref<32x1xf32, #tpu.memory_space<vmem>>, %arg5: memref<1xf32, #tpu.memory_space<smem>>, %arg6: memref<1x1x16xf32, #tpu.memory_space<vmem>>) attributes {dimension_semantics = [#tpu.dimension_semantics<parallel>], iteration_bounds = array<i64: 1>, scalar_prefetch = 0 : i64, scratch_operands = 0 : i64, tpu.core_type = #tpu.core_type<tc>, window_params = [{transform_indices = @transform_0, window_bounds = array<i64: 16, 32>}, {pipeline_mode = #tpu.pipeline_mode<synchronous>, transform_indices = @transform_1, window_bounds = array<i64: 32, 32>}, {pipeline_mode = #tpu.pipeline_mode<synchronous>, transform_indices = @transform_2, window_bounds = array<i64: 1, 32>}, {pipeline_mode = #tpu.pipeline_mode<synchronous>, transform_indices = @transform_3, window_bounds = array<i64: 32, 1>}, {transform_indices = @transform_4, window_bounds = array<i64: 1>}, {transform_indices = @transform_5, window_bounds = array<i64: 1, 1, 16>}]} {
    %c0 = arith.constant 0 : index
    %c0_0 = arith.constant 0 : index
    %0 = vector.load %arg1[%c0, %c0_0] : memref<16x32xf32, #tpu.memory_space<vmem>>, vector<16x32xf32>
    %c0_1 = arith.constant 0 : index
    %c0_2 = arith.constant 0 : index
    %1 = vector.load %arg2[%c0_1, %c0_2] : memref<32x32xf32, #tpu.memory_space<vmem>>, vector<32x32xf32>
    %cst = arith.constant dense<0.000000e+00> : vector<16x32xf32>
    %2 = tpu.matmul %0, %1, %cst {dimension_numbers = #tpu.dot_dimension_numbers<[1], [0], [0], [1], [0, 0, 1, 1], [], []>} : vector<16x32xf32>, vector<32x32xf32>, vector<16x32xf32> -> vector<16x32xf32>
    %c0_3 = arith.constant 0 : index
    %c0_4 = arith.constant 0 : index
    %3 = vector.load %arg3[%c0_3, %c0_4] : memref<1x32xf32, #tpu.memory_space<vmem>>, vector<1x32xf32>
    %4 = vector.broadcast %3 : vector<1x32xf32> to vector<16x32xf32>
    %5 = arith.addf %2, %4 : vector<16x32xf32>
    %cst_5 = arith.constant 0.000000e+00 : f32
    %6 = vector.broadcast %cst_5 : f32 to vector<16x32xf32>
    %7 = arith.maximumf %5, %6 : vector<16x32xf32>
    %c0_6 = arith.constant 0 : index
    %c0_7 = arith.constant 0 : index
    %8 = vector.load %arg4[%c0_6, %c0_7] : memref<32x1xf32, #tpu.memory_space<vmem>>, vector<32x1xf32>
    %cst_8 = arith.constant dense<0.000000e+00> : vector<16x1xf32>
    %9 = tpu.matmul %7, %8, %cst_8 {dimension_numbers = #tpu.dot_dimension_numbers<[1], [0], [0], [1], [0, 0, 1, 1], [], []>} : vector<16x32xf32>, vector<32x1xf32>, vector<16x1xf32> -> vector<16x1xf32>
    %c0_9 = arith.constant 0 : index
    %10 = memref.load %arg5[%c0_9] : memref<1xf32, #tpu.memory_space<smem>>
    %11 = vector.broadcast %10 : f32 to vector<16x1xf32>
    %12 = arith.addf %9, %11 : vector<16x1xf32>
    %13 = vector.shape_cast %12 : vector<16x1xf32> to vector<1x1x16xf32>
    %c0_10 = arith.constant 0 : index
    %c0_11 = arith.constant 0 : index
    %c0_12 = arith.constant 0 : index
    %14 = vector.load %arg6[%c0_10, %c0_11, %c0_12] : memref<1x1x16xf32, #tpu.memory_space<vmem>>, vector<1x1x16xf32>
    tpu.vector_store %arg6[%c0_10, %c0_11, %c0_12], %13 {strides = array<i32>} : memref<1x1x16xf32, #tpu.memory_space<vmem>>, vector<1x1x16xf32>,
    return
  }
  func.func @transform_0(%arg0: i32) -> (i32, i32) {
    %c0_i32 = arith.constant 0 : i32
    %c0_i32_0 = arith.constant 0 : i32
    return %arg0, %c0_i32 : i32, i32
  }
  func.func @transform_1(%arg0: i32) -> (i32, i32) {
    %c0_i32 = arith.constant 0 : i32
    %c0_i32_0 = arith.constant 0 : i32
    %c0_i32_1 = arith.constant 0 : i32
    return %c0_i32, %c0_i32_0 : i32, i32
  }
  func.func @transform_2(%arg0: i32) -> (i32, i32) {
    %c0_i32 = arith.constant 0 : i32
    %c0_i32_0 = arith.constant 0 : i32
    %c0_i32_1 = arith.constant 0 : i32
    return %c0_i32, %c0_i32_0 : i32, i32
  }
  func.func @transform_3(%arg0: i32) -> (i32, i32) {
    %c0_i32 = arith.constant 0 : i32
    %c0_i32_0 = arith.constant 0 : i32
    %c0_i32_1 = arith.constant 0 : i32
    return %c0_i32, %c0_i32_0 : i32, i32
  }
  func.func @transform_4(%arg0: i32) -> i32 {
    %c0_i32 = arith.constant 0 : i32
    %c0_i32_0 = arith.constant 0 : i32
    return %c0_i32 : i32
  }
  func.func @transform_5(%arg0: i32) -> (i32, i32, i32) {
    %c0_i32 = arith.constant 0 : i32
    %c0_i32_0 = arith.constant 0 : i32
    %c0_i32_1 = arith.constant 0 : i32
    return %arg0, %c0_i32, %c0_i32_0 : i32, i32, i32
  }
}

</mosaic_0001>

<llo_original>
// kernel: tpu_custom_call.1
$region0: #{tpu_custom_call.1}
  #allocation0 [shape = 'u32[]', space=smem, size = 0x4, offset = 0x4, fixed_abs, tag = 'smem constant byte address 0x4 - core index']
  #allocation1 [shape = 'u32[72,128]{1,0:T(1,128)}', space=vmem, size = 0x9000, scoped, tag = 'internal scratch']
  #allocation2 [shape = 'f32[1]{0:T(128)S(6)}', space=smem, size = 0x200, scoped, tag = 'scoped memory for tpu_custom_call.1']
  %s0 = inlined_call_operand.hbm [shape: f32[16,32], index: 0, kind: input, shape index: {}]
  %s1 = inlined_call_operand.vmem [shape: f32[32,32], index: 1, kind: input, shape index: {}]
  %s2 = inlined_call_operand.vmem [shape: f32[1,32], index: 2, kind: input, shape index: {}]
  %s3 = inlined_call_operand.vmem [shape: f32[32,1], index: 3, kind: input, shape index: {}]
  %s4 = inlined_call_operand.<no memory space> [shape: f32[1], index: 4, kind: input, shape index: {}]
  %s5 = inlined_call_operand.hbm [shape: f32[1,1,16], index: 5, kind: output, shape index: {}]
  %s6 = sld [smem:[#allocation0]]
  $region34: #{tpu_custom_call.1} parent=0
    _
  %s8 = ssub.s32 1, %s6
  %s9 = scalar_select 0, %s8, %s6
  %10 = sst [smem:[#allocation2]] %s4
  $region1: #{tpu_custom_call.1} parent=0
    #allocation3 [shape = 'u8[8192]{0}', space=vmem, size = 0x2000, scoped, tag = 'input window, operand 0, single buffered']
    #allocation4 [shape = 's32[1]{0}', space=sflag, size = 0x4, scoped, tag = 'scoped memory for tpu_custom_call.1']
    #allocation5 [shape = 's32[1]{0}', space=sflag, size = 0x4, scoped, tag = 'scoped memory for tpu_custom_call.1']
    #allocation6 [shape = 'u8[512]{0}', space=vmem, size = 0x400, scoped, tag = 'output window, operand 0, single buffered']
    %11 = vsyncpa [#allocation4], 0
    %12 = vsyncpa [#allocation5], 0
    // Predicated region
    $region2: #{tpu_custom_call.1} parent=1 // pred_check
      _
    $region3: #{tpu_custom_call.1} parent=1 // pred_check_branch
      %14 = sbr.rel (0) target = $region5
    $region4: #{tpu_custom_call.1} parent=1 // pred_region
      %16 = vsyncadd [#allocation4], 0
      %s17 = sshll.u32 %s0, 4
      %s18 = int_to_ptr.hbm [resolvable:$true] %s17
      %s19 = sshll.u32 [#allocation3], 4
      %s20 = int_to_ptr.vmem [resolvable:$true] %s19
      %25 = dma.hbm_to_vmem [thread:$0]  %s18, 256, %s20, [#allocation4], 128, 128, 8
    $region5: #{tpu_custom_call.1} parent=1 // pred_fallthru
      _
    // Predicated region
    $region6: #{tpu_custom_call.1} parent=1 // pred_check
      _
    $region7: #{tpu_custom_call.1} parent=1 // pred_check_branch
      %27 = sbr.rel (0) target = $region9
    $region8: #{tpu_custom_call.1} parent=1 // pred_region
      _
    $region9: #{tpu_custom_call.1} parent=1 // pred_fallthru
      _
    // Predicated region
    $region10: #{tpu_custom_call.1} parent=1 // pred_check
      _
    $region11: #{tpu_custom_call.1} parent=1 // pred_check_branch
      %29 = sbr.rel (0) target = $region13
    $region12: #{tpu_custom_call.1} parent=1 // pred_region
      _
    $region13: #{tpu_custom_call.1} parent=1 // pred_fallthru
      _
    // Predicated region
    $region14: #{tpu_custom_call.1} parent=1 // pred_check
      _
    $region15: #{tpu_custom_call.1} parent=1 // pred_check_branch
      %31 = sbr.rel (0) target = $region17
    $region16: #{tpu_custom_call.1} parent=1 // pred_region
      _
    $region17: #{tpu_custom_call.1} parent=1 // pred_fallthru
      _
    // Predicated region
    $region18: #{tpu_custom_call.1} parent=1 // pred_check
      _
    $region19: #{tpu_custom_call.1} parent=1 // pred_check_branch
      %33 = sbr.rel (0) target = $region21
    $region20: #{tpu_custom_call.1} parent=1 // pred_region
      _
    $region21: #{tpu_custom_call.1} parent=1 // pred_fallthru
      _
    // Predicated region
    $region22: #{tpu_custom_call.1} parent=1 // pred_check
      _
    $region23: #{tpu_custom_call.1} parent=1 // pred_check_branch
      %35 = sbr.rel (0) target = $region25
    $region24: #{tpu_custom_call.1} parent=1 // pred_region
      %37 = dma.done [#allocation4], 256
    $region25: #{tpu_custom_call.1} parent=1 // pred_fallthru
      _
    %v38 = vld [vmem:[#allocation3] sm:$0xff]
    %v39 = vld [vmem:[#allocation3 + $0x8] sm:$0xff]
    %v40 = vld [vmem:[%s1] sm:$0xff]
    %v41 = vld [vmem:[%s1 + $0x8] sm:$0xff]
    %v42 = vld [vmem:[%s1 + $0x10] sm:$0xff]
    %v43 = vld [vmem:[%s1 + $0x18] sm:$0xff]
    %v44 = vld [vmem:[%s2] sm:$0x1]
    %v46 = vperm.slane %v44, 0
    %vm48 = vcmask 261120
    %v50 = vsel %vm48, %v38, 0
    %v53 = vsel %vm48, %v39, 0
    %55 = vmatpush.msra.mxu0 0.0
    %56 = vmatpush.msra.mxu0 0.0
    %57 = vmatpush.msra.mxu0 0.0
    %58 = vmatpush.msra.mxu0 0.0
    %59 = vmatpush.msra.mxu0 0.0
    %60 = vmatpush.msra.mxu0 0.0
    %61 = vmatpush.msra.mxu0 0.0
    %62 = vmatpush.msra.mxu0 0.0
    %63 = vmatpush.msra.mxu0 0.0
    %64 = vmatpush.msra.mxu0 0.0
    %65 = vmatpush.msra.mxu0 0.0
    %66 = vmatpush.msra.mxu0 0.0
    %67 = vmatpush.msra.mxu0 %v43
    %68 = vmatpush.msra.mxu0 %v42
    %69 = vmatpush.msra.mxu0 %v41
    %70 = vmatpush.msra.mxu0 %v40
    %71 = vmatmul.f32.gmra.mxu0 %v50
    %v72 = vpop.f32.mrf.mxu0
    %v73 = vadd.f32 %v46, %v72
    %74 = vmatmul.f32.gmra.mxu0 %v53
    %v75 = vpop.f32.mrf.mxu0
    %v76 = vadd.f32 %v46, %v75
    %77 = vdwg.mxu0
    %v78 = vmax.f32 %v73, 0.0
    %v79 = vmax.f32 %v76, 0.0
    %v80 = vld [vmem:[%s3] sm:$0xff]
    %v81 = vld [vmem:[%s3 + $0x8] sm:$0xff]
    %v82 = vld [vmem:[%s3 + $0x10] sm:$0xff]
    %v83 = vld [vmem:[%s3 + $0x18] sm:$0xff]
    %s84 = sld [smem:[#allocation2]]
    %v85 = vstv %s84
    %v87 = vsel %vm48, %v78, 0
    %v90 = vsel %vm48, %v79, 0
    %92 = vmatpush.msra.mxu0 0.0
    %93 = vmatpush.msra.mxu0 0.0
    %94 = vmatpush.msra.mxu0 0.0
    %95 = vmatpush.msra.mxu0 0.0
    %96 = vmatpush.msra.mxu0 0.0
    %97 = vmatpush.msra.mxu0 0.0
    %98 = vmatpush.msra.mxu0 0.0
    %99 = vmatpush.msra.mxu0 0.0
    %100 = vmatpush.msra.mxu0 0.0
    %101 = vmatpush.msra.mxu0 0.0
    %102 = vmatpush.msra.mxu0 0.0
    %103 = vmatpush.msra.mxu0 0.0
    %104 = vmatpush.msra.mxu0 %v83
    %105 = vmatpush.msra.mxu0 %v82
    %106 = vmatpush.msra.mxu0 %v81
    %107 = vmatpush.msra.mxu0 %v80
    %108 = vmatmul.f32.gmra.mxu0 %v87
    %v109 = vpop.f32.mrf.mxu0
    %v110 = vadd.f32 %v85, %v109
    %111 = vmatmul.f32.gmra.mxu0 %v90
    %v112 = vpop.f32.mrf.mxu0
    %v113 = vadd.f32 %v85, %v112
    %114 = vdwg.mxu0
    %117 = vset.pattern.permute.xlu0 0
    %118 = vperm.xlu0 %117, %v110
    %v119 = vpop.permute.xlu0 %118
    %120 = vset.pattern.permute.xlu0 0
    %121 = vperm.xlu0 %120, %v113
    %v122 = vpop.permute.xlu0 %121
    %v123 = vlaneseq
    %v124 = vand.u32 %v123, 127
    %v125 = vperm.slane %v119, %v124
    %v126 = vadd.s32 %v124, 4294967288
    %v127 = vperm.slane %v122, %v126
    %vm128 = vcmask 130112
    %v129 = vsel %vm128, %v127, %v125
    %vm131 = vcmask 122880
    %132 = vst.msk [vmem:[#allocation6] sm:$0x1] %vm131, %v129
    // Predicated region
    $region26: #{tpu_custom_call.1} parent=1 // pred_check
      _
    $region27: #{tpu_custom_call.1} parent=1 // pred_check_branch
      %134 = sbr.rel (0) target = $region29
    $region28: #{tpu_custom_call.1} parent=1 // pred_region
      %136 = vsyncadd [#allocation5], 0
      %s138 = sshll.u32 [#allocation6], 4
      %s139 = int_to_ptr.vmem [resolvable:$true] %s138
      %s140 = sshll.u32 %s5, 4
      %s141 = int_to_ptr.hbm [resolvable:$true] %s140
      %143 = dma.vmem_to_hbm [thread:$0]  %s139, 16, %s141, [#allocation5]
    $region29: #{tpu_custom_call.1} parent=1 // pred_fallthru
      _
    // Predicated region
    $region30: #{tpu_custom_call.1} parent=1 // pred_check
      _
    $region31: #{tpu_custom_call.1} parent=1 // pred_check_branch
      %145 = sbr.rel (0) target = $region33
    $region32: #{tpu_custom_call.1} parent=1 // pred_region
      %147 = dma.done [#allocation5], 16
    $region33: #{tpu_custom_call.1} parent=1 // pred_fallthru
      _
    %148 = vsyncpa [#allocation4], 1
    %149 = vsyncpa [#allocation5], 1

</llo_original>
